<compile_context>
chip_gen: v7x
topology: tpu7x:2x2x1
jax: 0.10.0
libtpu: 0.0.40
codegen_flags: <defaults>
</compile_context>

<pallas_src>
import functools

import jax
import jax.numpy as jnp
from jax.experimental import pallas as pl
from jax.experimental.pallas import tpu as pltpu


def _vmem_capacity_bytes():
    """Per-TensorCore VMEM capacity (generation-aware)."""
    try:
        return int(pltpu.get_tpu_info().vmem_capacity_bytes)
    except Exception:
        # Be conservative (v7x has 64 MiB per TC) if the query is unavailable.
        return 64 * 1024 * 1024


def _pick_tn(n, k, *, max_tile=2048, w_dbuf_bytes=None):
    """Pick an output-axis tile: a multiple of 128 that divides n and keeps the
    double-buffered (k, tn) bf16 weight stream under `w_dbuf_bytes`."""
    if w_dbuf_bytes is None:
        w_dbuf_bytes = _vmem_capacity_bytes() // 4
    if n % 128 != 0:
        # Irregular last dim -> single full block (block == full dims is legal).
        # Guard so a large irregular out_dim cannot silently blow VMEM.
        assert 2 * 2 * k * n <= w_dbuf_bytes, (
            "irregular out_dim too large for a single weight block")
        # TODO(synk): tile K as well for large irregular out_dim.
        return n
    budget = max(128, (w_dbuf_bytes // (2 * 2 * k)) // 128 * 128)
    tn = min(n, max_tile, budget)
    while tn > 128 and n % tn != 0:
        tn -= 128
    return tn


def _tile_weight(w, tn):
    """(K, N) -> (N // TN, K, TN) contiguous tiles (done once at init)."""
    k, n = w.shape
    assert n % tn == 0
    return jnp.transpose(w.reshape(k, n // tn, tn), (1, 0, 2))


def _linear_kernel(x_ref, w_ref, b_ref, o_ref, *, apply_tanh, tn, n):
    # x_ref : (M, K)      bf16, resident across the whole grid (block (0, 0))
    # w_ref : (K, TN)     bf16, one CONTIGUOUS pre-tiled weight slab per step
    # b_ref : (1, N)      bf16, resident full bias (sliced in-kernel)
    # o_ref : (M, TN)     bf16, output tile
    y = jnp.dot(x_ref[...], w_ref[...], preferred_element_type=jnp.float32)
    if tn == n:
        b = b_ref[...]
    else:
        start = pl.multiple_of(pl.program_id(0) * tn, tn)
        b = b_ref[:, pl.ds(start, tn)]
    y = y + b.astype(jnp.float32)
    if apply_tanh:
        y = jnp.tanh(y)
    o_ref[...] = y.astype(o_ref.dtype)


def linear_pallas(x, w_tiled, b, *, apply_tanh=False):
    """y = (tanh?)(x @ W + b).

    x resident in VMEM; W pre-tiled as (N//TN, K, TN) so each grid step fetches
    one contiguous slab; bias resident; grid axis over output columns marked
    "parallel" (v7x: both TensorCores split the weight stream)."""
    m, k = x.shape
    n_tiles, kw, tn = w_tiled.shape
    n = n_tiles * tn
    assert kw == k and b.shape == (1, n)
    grid = (n_tiles,)

    kernel = functools.partial(_linear_kernel, apply_tanh=apply_tanh, tn=tn, n=n)
    cost = pl.CostEstimate(
        flops=2 * m * k * n,
        transcendentals=m * n if apply_tanh else 0,
        bytes_accessed=2 * (m * k + k * n + n + m * n),  # bf16 bytes
    )

    cap = _vmem_capacity_bytes()
    vmem_limit = min(cap * 3 // 4, 96 * 1024 * 1024)

    return pl.pallas_call(
        kernel,
        out_shape=jax.ShapeDtypeStruct((m, n), jnp.bfloat16),
        grid_spec=pltpu.PrefetchScalarGridSpec(
            num_scalar_prefetch=0,
            grid=grid,
            in_specs=[
                pl.BlockSpec((m, k), lambda j: (0, 0)),               # x: resident
                pl.BlockSpec((pl.Squeezed(), k, tn),
                             lambda j: (j, 0, 0)),                    # W: contiguous tiles
                pl.BlockSpec((1, n), lambda j: (0, 0)),               # b: resident
            ],
            out_specs=pl.BlockSpec((m, tn), lambda j: (0, j)),
        ),
        compiler_params=pltpu.CompilerParams(
            dimension_semantics=("parallel",),
            vmem_limit_bytes=int(vmem_limit),
        ),
        cost_estimate=cost,
    )(x, w_tiled, b)


class PrefixTuningPastKeyValuesJAX:
    """JAX/Pallas port of PrefixTuningPastKeyValues (deterministic params).

    Matches the PyTorch module's bf16 Embedding + bf16 Linear(+Tanh+Linear)."""

    def __init__(self, match_n_layer, match_n_head, n_embd, prefix_length=8,
                 key=None):
        assert n_embd % match_n_head == 0
        self.prefix_length = prefix_length
        self.match_n_layer = match_n_layer
        self.match_n_head = match_n_head
        self.match_n_embd = n_embd // match_n_head
        self.n_embd = n_embd
        self.mid_dim = n_embd
        self.out_dim = match_n_layer * 2 * n_embd

        if key is None:
            key = jax.random.PRNGKey(0)
        k_emb, k_w1, k_b1, k_w2, k_b2 = jax.random.split(key, 5)

        # nn.Embedding default init ~ N(0, 1), stored bf16 (as in the module).
        self.prefix_embedding = jax.random.normal(
            k_emb, (prefix_length, n_embd), dtype=jnp.float32
        ).astype(jnp.bfloat16)

        # nn.Linear default init ~ U(-1/sqrt(in), 1/sqrt(in)); weights stored
        # pre-transposed as (in_dim, out_dim) so the kernel does x @ W.
        lim1 = 1.0 / (n_embd ** 0.5)
        self.w1 = jax.random.uniform(
            k_w1, (n_embd, self.mid_dim), minval=-lim1, maxval=lim1,
            dtype=jnp.float32).astype(jnp.bfloat16)
        self.b1 = jax.random.uniform(
            k_b1, (1, self.mid_dim), minval=-lim1, maxval=lim1,
            dtype=jnp.float32).astype(jnp.bfloat16)

        lim2 = 1.0 / (self.mid_dim ** 0.5)
        self.w2 = jax.random.uniform(
            k_w2, (self.mid_dim, self.out_dim), minval=-lim2, maxval=lim2,
            dtype=jnp.float32).astype(jnp.bfloat16)
        self.b2 = jax.random.uniform(
            k_b2, (1, self.out_dim), minval=-lim2, maxval=lim2,
            dtype=jnp.float32).astype(jnp.bfloat16)

        # Pre-tile the weights once so every kernel-side tile fetch is one
        # contiguous HBM DMA (review item 1).  Generation-aware tile budget.
        dbuf = _vmem_capacity_bytes() // 4
        self.tn1 = _pick_tn(self.mid_dim, self.n_embd, w_dbuf_bytes=dbuf)
        self.tn2 = _pick_tn(self.out_dim, self.mid_dim, w_dbuf_bytes=dbuf)
        self.w1_tiled = _tile_weight(self.w1, self.tn1)
        self.w2_tiled = _tile_weight(self.w2, self.tn2)

    def __call__(self, bsz):
        # input_tokens = arange(prefix_length) for every batch row -> the
        # embedding gather is the identity on the table, and the MLP input is
        # batch-invariant: run it once on (L, E) and broadcast afterwards.
        x = self.prefix_embedding                                   # (L, E) bf16

        # Hot path: Linear -> Tanh -> Linear, each a tiled Pallas kernel.
        h = linear_pallas(x, self.w1_tiled, self.b1, apply_tanh=True)   # (L, mid)
        y = linear_pallas(h, self.w2_tiled, self.b2, apply_tanh=False)  # (L, out)

        L = self.prefix_length
        # view -> (L, 2*n_layer, n_head, head_dim); permute on the SMALL
        # batch-invariant array, then broadcast the batch dimension.
        # TODO(synk): could emit the output directly in this layout with a 2D
        #             grid + 4D lane-dense out_spec; cleanup-level win only.
        y = y.reshape(L, 2 * self.match_n_layer, self.match_n_head,
                      self.match_n_embd)
        y = jnp.transpose(y, (1, 2, 0, 3))      # (2*n_layer, n_head, L, hd)
        y = jnp.broadcast_to(
            y[:, None],
            (2 * self.match_n_layer, bsz, self.match_n_head, L,
             self.match_n_embd))                # (2*n_layer, bsz, n_head, L, hd)

        # split(2) along dim 0 -> legacy cache: tuple of (key, value) per layer
        legacy_cache = tuple(
            (y[2 * i], y[2 * i + 1]) for i in range(self.match_n_layer)
        )
        return legacy_cache


if __name__ == "__main__":
    # Small shapes consistent with the module.
    # TODO(synk): these toy dims (n_embd=32) under-fill the 128-lane vregs;
    #             benchmark only at production n_embd.
    match_n_layer = 2
    match_n_head = 4
    n_embd = 32
    prefix_length = 8
    bsz = 2
    head_dim = n_embd // match_n_head

    module = PrefixTuningPastKeyValuesJAX(
        match_n_layer=match_n_layer,
        match_n_head=match_n_head,
        n_embd=n_embd,
        prefix_length=prefix_length,
        key=jax.random.PRNGKey(0),
    )

    cache = module(bsz)
    cache = jax.block_until_ready(cache)

    # Shape / dtype sanity checks.
    assert len(cache) == match_n_layer
    for k_, v_ in cache:
        assert k_.shape == (bsz, match_n_head, prefix_length, head_dim)
        assert v_.shape == (bsz, match_n_head, prefix_length, head_dim)
        assert k_.dtype == jnp.bfloat16 and v_.dtype == jnp.bfloat16

    # Pure-JAX reference of the full batched forward (matches PyTorch path).
    tokens = jnp.broadcast_to(jnp.arange(prefix_length)[None, :],
                              (bsz, prefix_length))
    prefix = module.prefix_embedding[tokens]                  # (bsz, L, E)
    x2d = prefix.reshape(bsz * prefix_length, n_embd)
    h_ref = jnp.tanh(
        jnp.dot(x2d, module.w1, preferred_element_type=jnp.float32)
        + module.b1.astype(jnp.float32)).astype(jnp.bfloat16)
    y_ref = (jnp.dot(h_ref, module.w2, preferred_element_type=jnp.float32)
             + module.b2.astype(jnp.float32)).astype(jnp.bfloat16)
    pkv = y_ref.reshape(bsz, prefix_length, 2 * match_n_layer,
                        match_n_head, head_dim)
    pkv = jnp.transpose(pkv, (2, 0, 3, 1, 4))  # (2*n_layer, bsz, n_head, L, hd)

    for i in range(match_n_layer):
        k_ker, v_ker = cache[i]
        assert jnp.allclose(k_ker.astype(jnp.float32),
                            pkv[2 * i].astype(jnp.float32),
                            atol=2e-2, rtol=2e-2)
        assert jnp.allclose(v_ker.astype(jnp.float32),
                            pkv[2 * i + 1].astype(jnp.float32),
                            atol=2e-2, rtol=2e-2)

    print("KERNEL_OK")
</pallas_src>

<mosaic_0001>
module attributes {stable_mosaic.version = 11 : i64} {
  func.func @_linear_kernel(%arg0: i32, %arg1: memref<8x32xbf16, #tpu.memory_space<vmem>>, %arg2: memref<1x32x32xbf16, #tpu.memory_space<vmem>>, %arg3: memref<1x32xbf16, #tpu.memory_space<vmem>>, %arg4: memref<8x32xbf16, #tpu.memory_space<vmem>>) attributes {dimension_semantics = [#tpu.dimension_semantics<parallel>], iteration_bounds = array<i64: 1>, scalar_prefetch = 0 : i64, scratch_operands = 0 : i64, tpu.core_type = #tpu.core_type<tc>, window_params = [{pipeline_mode = #tpu.pipeline_mode<synchronous>, transform_indices = @transform_0, window_bounds = array<i64: 8, 32>}, {transform_indices = @transform_1, window_bounds = array<i64: 1, 32, 32>}, {pipeline_mode = #tpu.pipeline_mode<synchronous>, transform_indices = @transform_2, window_bounds = array<i64: 1, 32>}, {transform_indices = @transform_3, window_bounds = array<i64: 8, 32>}]} {
    %c0 = arith.constant 0 : index
    %c0_0 = arith.constant 0 : index
    %0 = vector.load %arg1[%c0, %c0_0] : memref<8x32xbf16, #tpu.memory_space<vmem>>, vector<8x32xbf16>
    %c0_1 = arith.constant 0 : index
    %c0_2 = arith.constant 0 : index
    %c0_3 = arith.constant 0 : index
    %1 = vector.load %arg2[%c0_1, %c0_2, %c0_3] : memref<1x32x32xbf16, #tpu.memory_space<vmem>>, vector<1x32x32xbf16>
    %2 = vector.shape_cast %1 : vector<1x32x32xbf16> to vector<32x32xbf16>
    %cst = arith.constant dense<0.000000e+00> : vector<8x32xf32>
    %3 = tpu.matmul %0, %2, %cst {dimension_numbers = #tpu.dot_dimension_numbers<[1], [0], [0], [1], [0, 0, 1, 1], [], []>} : vector<8x32xbf16>, vector<32x32xbf16>, vector<8x32xf32> -> vector<8x32xf32>
    %c0_4 = arith.constant 0 : index
    %c0_5 = arith.constant 0 : index
    %4 = vector.load %arg3[%c0_4, %c0_5] : memref<1x32xbf16, #tpu.memory_space<vmem>>, vector<1x32xbf16>
    %5 = arith.extf %4 : vector<1x32xbf16> to vector<1x32xf32>
    %6 = vector.broadcast %5 : vector<1x32xf32> to vector<8x32xf32>
    %7 = arith.addf %3, %6 : vector<8x32xf32>
    %8 = math.tanh %7 : vector<8x32xf32>
    %9 = arith.truncf %8 : vector<8x32xf32> to vector<8x32xbf16>
    %c0_6 = arith.constant 0 : index
    %c0_7 = arith.constant 0 : index
    %10 = vector.load %arg4[%c0_6, %c0_7] : memref<8x32xbf16, #tpu.memory_space<vmem>>, vector<8x32xbf16>
    tpu.vector_store %arg4[%c0_6, %c0_7], %9 {strides = array<i32>} : memref<8x32xbf16, #tpu.memory_space<vmem>>, vector<8x32xbf16>,
    return
  }
  func.func @transform_0(%arg0: i32) -> (i32, i32) {
    %c0_i32 = arith.constant 0 : i32
    %c0_i32_0 = arith.constant 0 : i32
    %c0_i32_1 = arith.constant 0 : i32
    return %c0_i32, %c0_i32_0 : i32, i32
  }
  func.func @transform_1(%arg0: i32) -> (i32, i32, i32) {
    %c0_i32 = arith.constant 0 : i32
    %c0_i32_0 = arith.constant 0 : i32
    %c0_i32_1 = arith.constant 0 : i32
    return %arg0, %c0_i32, %c0_i32_0 : i32, i32, i32
  }
  func.func @transform_2(%arg0: i32) -> (i32, i32) {
    %c0_i32 = arith.constant 0 : i32
    %c0_i32_0 = arith.constant 0 : i32
    %c0_i32_1 = arith.constant 0 : i32
    return %c0_i32, %c0_i32_0 : i32, i32
  }
  func.func @transform_3(%arg0: i32) -> (i32, i32) {
    %c0_i32 = arith.constant 0 : i32
    %c0_i32_0 = arith.constant 0 : i32
    return %c0_i32, %arg0 : i32, i32
  }
}

</mosaic_0001>

<llo_original>
// kernel: tpu_custom_call.1
$region0: #{tpu_custom_call.1}
  #allocation0 [shape = 'u32[]', space=smem, size = 0x4, offset = 0x4, fixed_abs, tag = 'smem constant byte address 0x4 - core index']
  #allocation1 [shape = 'u32[144,128]{1,0:T(1,128)}', space=vmem, size = 0x12000, scoped, tag = 'internal scratch']
  %s0 = inlined_call_operand.hbm [shape: bf16[8,32], index: 0, kind: input, shape index: {}]
  %s1 = inlined_call_operand.hbm [shape: bf16[1,32,32], index: 1, kind: input, shape index: {}]
  %s2 = inlined_call_operand.vmem [shape: bf16[1,32], index: 2, kind: input, shape index: {}]
  %s3 = inlined_call_operand.hbm [shape: bf16[8,32], index: 3, kind: output, shape index: {}]
  %s4 = sld [smem:[#allocation0]]
  $region30: #{tpu_custom_call.1} parent=0
    _
  %s6 = ssub.s32 1, %s4
  %s7 = scalar_select 0, %s6, %s4
  $region1: #{tpu_custom_call.1} parent=0
    #allocation2 [shape = 'u8[2048]{0}', space=vmem, size = 0x800, scoped, tag = 'input window, operand 0, single buffered']
    #allocation3 [shape = 's32[1]{0}', space=sflag, size = 0x4, scoped, tag = 'scoped memory for tpu_custom_call.1']
    #allocation4 [shape = 's32[1]{0}', space=sflag, size = 0x4, scoped, tag = 'scoped memory for tpu_custom_call.1']
    #allocation5 [shape = 'u8[8192]{0}', space=vmem, size = 0x2000, scoped, tag = 'input window, operand 1, single buffered']
    #allocation6 [shape = 's32[1]{0}', space=sflag, size = 0x4, scoped, tag = 'scoped memory for tpu_custom_call.1']
    #allocation7 [shape = 'u8[2048]{0}', space=vmem, size = 0x800, scoped, tag = 'output window, operand 0, single buffered']
    %8 = vsyncpa [#allocation3], 0
    %9 = vsyncpa [#allocation6], 0
    %10 = vsyncpa [#allocation4], 0
    // Predicated region
    $region2: #{tpu_custom_call.1} parent=1 // pred_check
      _
    $region3: #{tpu_custom_call.1} parent=1 // pred_check_branch
      %12 = sbr.rel (0) target = $region5
    $region4: #{tpu_custom_call.1} parent=1 // pred_region
      %s14 = ssub.s32 64, 64
      %15 = vsyncadd [#allocation3], %s14
      %s17 = sshll.u32 [#allocation2], 4
      %s18 = int_to_ptr.vmem [resolvable:$true] %s17
      %20 = dma.hbm_to_vmem [thread:$0]  %s0, 64, %s18, [#allocation3]
    $region5: #{tpu_custom_call.1} parent=1 // pred_fallthru
      _
    // Predicated region
    $region6: #{tpu_custom_call.1} parent=1 // pred_check
      _
    $region7: #{tpu_custom_call.1} parent=1 // pred_check_branch
      %22 = sbr.rel (0) target = $region9
    $region8: #{tpu_custom_call.1} parent=1 // pred_region
      %s24 = ssub.s32 256, 256
      %25 = vsyncadd [#allocation6], %s24
      %s26 = sshll.u32 [#allocation5], 4
      %s27 = int_to_ptr.vmem [resolvable:$true] %s26
      %32 = dma.hbm_to_vmem [thread:$0]  %s1, 256, %s27, [#allocation6], 64, 64, 4
    $region9: #{tpu_custom_call.1} parent=1 // pred_fallthru
      _
    // Predicated region
    $region10: #{tpu_custom_call.1} parent=1 // pred_check
      _
    $region11: #{tpu_custom_call.1} parent=1 // pred_check_branch
      %34 = sbr.rel (0) target = $region13
    $region12: #{tpu_custom_call.1} parent=1 // pred_region
      _
    $region13: #{tpu_custom_call.1} parent=1 // pred_fallthru
      _
    // Predicated region
    $region14: #{tpu_custom_call.1} parent=1 // pred_check
      _
    $region15: #{tpu_custom_call.1} parent=1 // pred_check_branch
      %36 = sbr.rel (0) target = $region17
    $region16: #{tpu_custom_call.1} parent=1 // pred_region
      %37 = dma.done [#allocation3], 64
    $region17: #{tpu_custom_call.1} parent=1 // pred_fallthru
      _
    // Predicated region
    $region18: #{tpu_custom_call.1} parent=1 // pred_check
      _
    $region19: #{tpu_custom_call.1} parent=1 // pred_check_branch
      %39 = sbr.rel (0) target = $region21
    $region20: #{tpu_custom_call.1} parent=1 // pred_region
      %40 = dma.done [#allocation6], 256
    $region21: #{tpu_custom_call.1} parent=1 // pred_fallthru
      _
    %v42 = vld [vmem:[#allocation2] sm:$0xf]
    %v43 = vld [vmem:[#allocation5] sm:$0xf]
    %v44 = vld [vmem:[#allocation5 + $0x4] sm:$0xf]
    %v45 = vld [vmem:[#allocation5 + $0x8] sm:$0xf]
    %v46 = vld [vmem:[#allocation5 + $0xc] sm:$0xf]
    %v47 = vld [vmem:[%s2] sm:$0x1]
    %v48 = vunpack.c.l.bf16 %v47
    %v49 = vlaneseq
    %v50 = vshrl.u32 %v49, 7
    %v51 = vsub.s32 0, %v50
    %v52 = vrot.slane %v48, %v51
    %v57 = vunpack.c.l.b16 %v43
    %v58 = vunpack.c.l.b16 %v44
    %v59 = vunpack.c.l.b16 %v45
    %v60 = vunpack.c.l.b16 %v46
    %v61 = vpack.c.b16 %v58, %v57
    %v62 = vpack.c.b16 %v60, %v59
    %vm65 = vcmask 261120
    %v67 = vsel %vm65, %v42, 0
    %69 = vmatprep.subr.bf16.mxu0 0
    %70 = vmatpush1.bf16.msra.mxu0 %v61
    %71 = vmatprep.subr.bf16.mxu0 0
    %72 = vmatpush1.bf16.msra.mxu0 %v62
    %73 = vmatprep.subr.bf16.mxu0 0
    %74 = vmatpush1.bf16.msra.mxu0 0
    %75 = vmatprep.subr.bf16.mxu0 0
    %76 = vmatpush1.bf16.msra.mxu0 0
    %77 = vmatprep.subr.bf16.mxu0 0
    %78 = vmatpush1.bf16.msra.mxu0 0
    %79 = vmatprep.subr.bf16.mxu0 0
    %80 = vmatpush1.bf16.msra.mxu0 0
    %81 = vmatprep.subr.bf16.mxu0 0
    %82 = vmatpush1.bf16.msra.mxu0 0
    %83 = vmatprep.subr.bf16.mxu0 0
    %84 = vmatpush1.bf16.msra.mxu0 0
    %85 = vmatprep.subr.bf16.mxu0 0
    %86 = vmatpush1.bf16.msra.mxu0 0
    %87 = vmatprep.subr.bf16.mxu0 0
    %88 = vmatpush1.bf16.msra.mxu0 0
    %89 = vmatprep.subr.bf16.mxu0 0
    %90 = vmatpush1.bf16.msra.mxu0 0
    %91 = vmatprep.subr.bf16.mxu0 0
    %92 = vmatpush1.bf16.msra.mxu0 0
    %93 = vmatprep.subr.bf16.mxu0 0
    %94 = vmatpush1.bf16.msra.mxu0 0
    %95 = vmatprep.subr.bf16.mxu0 0
    %96 = vmatpush1.bf16.msra.mxu0 0
    %97 = vmatprep.subr.bf16.mxu0 0
    %98 = vmatpush1.bf16.msra.mxu0 0
    %99 = vmatprep.subr.bf16.mxu0 0
    %100 = vmatpush1.bf16.msra.mxu0 0
    %101 = vmatprep.mubr.bf16.mxu0 0
    %102 = vmatmul.mubr.bf16.gmra.mrb[0].mxu0 %v67
    %v103 = vpop.f32.mrb[0].mxu0
    %v104 = vadd.f32 %v52, %v103
    %v105 = vpop.f32.mrb[0].mxu0
    %v106 = vpop.f32.mrb[0].mxu0
    %v107 = vpop.f32.mrb[0].mxu0
    %108 = vdwg.mxu0
    %v109 = vtanh.pop %v104
    %v110 = vpack.c.bf16 %v109, %v109
    %vm111 = vcmask 257024
    %112 = vst.msk [vmem:[#allocation7] sm:$0xf] %vm111, %v110
    // Predicated region
    $region22: #{tpu_custom_call.1} parent=1 // pred_check
      _
    $region23: #{tpu_custom_call.1} parent=1 // pred_check_branch
      %114 = sbr.rel (0) target = $region25
    $region24: #{tpu_custom_call.1} parent=1 // pred_region
      %s116 = ssub.s32 64, 64
      %117 = vsyncadd [#allocation4], %s116
      %s119 = sshll.u32 [#allocation7], 4
      %s120 = int_to_ptr.vmem [resolvable:$true] %s119
      %122 = dma.vmem_to_hbm [thread:$0]  %s120, 64, %s3, [#allocation4]
    $region25: #{tpu_custom_call.1} parent=1 // pred_fallthru
      _
    // Predicated region
    $region26: #{tpu_custom_call.1} parent=1 // pred_check
      _
    $region27: #{tpu_custom_call.1} parent=1 // pred_check_branch
      %124 = sbr.rel (0) target = $region29
    $region28: #{tpu_custom_call.1} parent=1 // pred_region
      %125 = dma.done [#allocation4], 64
    $region29: #{tpu_custom_call.1} parent=1 // pred_fallthru
      _
    %126 = vsyncpa [#allocation3], 1
    %127 = vsyncpa [#allocation6], 1
    %128 = vsyncpa [#allocation4], 1

</llo_original>
